<compile_context>
chip_gen: v6e
topology: v6e:2x2x1
jax: 0.10.0
libtpu: 0.0.40
codegen_flags: <defaults>
</compile_context>

<pallas_src>
import functools

import jax
import jax.numpy as jnp
from jax.experimental import pallas as pl
from jax.experimental.pallas import tpu as pltpu


def _cdiv(a, b):
    return -(-a // b)


# --------------------------------------------------------------------------- #
# Kernel
# --------------------------------------------------------------------------- #
def _dsconv_kernel(x_ref, left_ref, right_ref, wd_ref, wp_ref, bp_ref, out_ref,
                   *, k, pad, tl, lc, mxu_dtype):
    """One (packed-batch, L-tile) grid point.

    x_ref    : (1, Ri, TL)   current L tile (rows = BT*Cin, L on lanes)
    left_ref : (1, Ri, 128)  previous 128-lane chunk (clamped at sequence start)
    right_ref: (1, Ri, 128)  next 128-lane chunk (clamped at sequence end)
    wd_ref   : (k, Ri, 1)    depthwise taps (per-row columns, batch-tiled)
    wp_ref   : (Ro, Ri)      block-diagonal pointwise weight (Ro = BT*Cout)
    bp_ref   : (Ro, 1)       pointwise bias (depthwise bias folded in)
    out_ref  : (1, Ro, TL)   lane-dense output tile
    """
    f32 = jnp.float32
    j = pl.program_id(1)
    nj = pl.num_programs(1)
    ri = x_ref.shape[1]
    nchunks = tl // lc

    # Halo chunks, zero-masked at the sequence edges (the conv's 'same' zero
    # padding).  jnp.where (not a 0.0 multiply) so clamped inf/NaN halo data
    # cannot leak into the padding region.
    zeros128 = jnp.zeros((ri, 128), f32)
    left = jnp.where(j == 0, zeros128, left_ref[0].astype(f32))
    right = jnp.where(j == nj - 1, zeros128, right_ref[0].astype(f32))

    # Small parameters, loaded once per tile.
    wd = [wd_ref[t].astype(f32) for t in range(k)]            # k x (Ri, 1)
    wp = wp_ref[...].astype(mxu_dtype)                        # (Ro, Ri)
    bp = bp_ref[...].astype(f32)                              # (Ro, 1)

    # Process the tile in lane-aligned sub-chunks so the live f32 working set
    # (extended window + depthwise acc + pointwise out) stays vreg-friendly;
    # no VMEM scratch store/reload of the extended tile.
    for c in range(nchunks):                                  # static unroll
        lo = c * lc
        prev = left if c == 0 else x_ref[0, :, lo - 128:lo].astype(f32)
        nxt = (right if c == nchunks - 1
               else x_ref[0, :, lo + lc:lo + lc + 128].astype(f32))
        mid = x_ref[0, :, lo:lo + lc].astype(f32)
        xe = jnp.concatenate([prev, mid, nxt], axis=-1)       # (Ri, lc + 256)

        # Depthwise conv: k static lane-shifted MACs on the VPU.
        acc = xe[:, 128 - pad:128 - pad + lc] * wd[0]
        for t in range(1, k):
            off = 128 - pad + t
            acc = acc + xe[:, off:off + lc] * wd[t]

        # Pointwise 1x1 conv on the MXU (bf16 operands by default, f32 accum).
        out = jnp.dot(wp, acc.astype(mxu_dtype), preferred_element_type=f32)
        out_ref[0, :, lo:lo + lc] = (out + bp).astype(out_ref.dtype)


# --------------------------------------------------------------------------- #
# Tiling / packing heuristics
# --------------------------------------------------------------------------- #
def _pick_batch_pack(n, c_in):
    """Fold batch into sublanes when Cin alone can't fill a vreg's 8 sublanes."""
    if c_in >= 8 or n == 1:
        return 1
    want = _cdiv(8, c_in)
    for bt in range(want, n + 1):
        if n % bt == 0:
            return bt
    return n                      # n * c_in < 8: pack every batch together


def _vmem_budget_bytes():
    """Generation-aware scoped-VMEM budget (v7x: 64 MiB/TC, v5e/v6e: 128 MiB)."""
    cap = 64 * 1024 * 1024        # conservative fallback = v7x per-core VMEM
    try:
        info = pltpu.get_tpu_info()
        cap = int(getattr(info, "vmem_capacity_bytes", cap)) or cap
    except Exception:
        pass
    return max(32 * 1024 * 1024, (3 * cap) // 4)   # headroom for temporaries


def _pick_tiles(l, rows_in, rows_out, k, n_batch_blocks, tl_max, budget):
    """Choose (tl, lc, nj, l_pad): L tile, in-kernel chunk, #tiles, padded L."""
    nb = _cdiv(l, 128)                          # 128-lane blocks covering L
    # Per-step double-buffered blocks: main in + out scale with TL; two 128-lane
    # halo blocks and the (tiny) weight/bias blocks are fixed.
    fixed = 4 * (4 * rows_in * 128
                 + 2 * (k * rows_in + rows_in * rows_out + rows_out))
    per_lane = 8 * (rows_in + rows_out)         # f32, double-buffered
    lim = (2 * budget) // 3                     # leave room for compute temps
    tl_fit = max(128, ((lim - fixed) // per_lane) // 128 * 128)
    bpt_cap = max(1, min(tl_max, tl_fit) // 128)

    nj = _cdiv(nb, bpt_cap)
    if n_batch_blocks == 1 and nj == 1 and nb >= 2:
        nj = 2                                  # keep v7x's 2nd TensorCore busy
    bpt = _cdiv(nb, nj)
    tl = 128 * bpt
    l_pad = nj * tl

    # In-kernel chunk: a lane-aligned divisor of TL with a bounded live set.
    lc = 128
    for cand in (512, 384, 256, 128):
        live = 4 * (rows_in * (cand + 256) + rows_in * cand + rows_out * cand)
        if tl % cand == 0 and live <= 160 * 1024:
            lc = cand
            break
    return tl, lc, nj, l_pad


# --------------------------------------------------------------------------- #
# Wrapper
# --------------------------------------------------------------------------- #
def depthwise_separable_conv1d(x, wd, bd, wp, bp, k, *, tl_max=4096,
                               mxu_bf16=True):
    """x: (N, Cin, L) NCL layout (PyTorch convention).
    wd: (Cin, 1, k) depthwise weight, bd: (Cin,) depthwise bias.
    wp: (Cout, Cin, 1) pointwise weight, bp: (Cout,) pointwise bias.
    Returns (N, Cout, L) — same-length output (odd k, padding=k//2).
    """
    n, c_in, l = x.shape
    c_out = wp.shape[0]
    # TODO(synk): even-k kernels change the output length (L+1); only odd k here.
    assert k % 2 == 1, "same-length output requires odd kernel size"
    pad = k // 2
    assert pad <= 128, "kernel size too large for the 128-lane halo"

    bt = _pick_batch_pack(n, c_in)
    n_b = n // bt
    rows_in = bt * c_in
    rows_out = bt * c_out

    budget = _vmem_budget_bytes()
    tl, lc, nj, l_pad = _pick_tiles(l, rows_in, rows_out, k, n_b, tl_max, budget)
    bpt = tl // 128
    nb_pad = l_pad // 128

    # Pad L to the tiled length (the zeros double as the conv's 'same' padding)
    # and fold BT batches into the sublane dimension (pure reshapes, no
    # transposes, no extra HBM passes beyond the pad when L isn't tile-aligned).
    xp = x if l_pad == l else jnp.pad(x, ((0, 0), (0, 0), (0, l_pad - l)))
    xp = xp.reshape(n_b, rows_in, l_pad)

    # Parameter prep (tiny, done once): depthwise taps as (k, BT*Cin, 1)
    # columns, block-diagonal pointwise weight (keeps packed batches
    # independent), depthwise bias folded into the pointwise bias.
    wd_k = jnp.tile(jnp.transpose(wd, (2, 0, 1)), (1, bt, 1))        # (k, Ri, 1)
    wp2 = wp[:, :, 0]                                                # (Cout, Cin)
    wp_bd = jnp.kron(jnp.eye(bt, dtype=wp2.dtype), wp2)              # (Ro, Ri)
    bp_eff = jnp.tile(wp2 @ bd + bp, (bt,)).reshape(rows_out, 1)     # (Ro, 1)

    in_specs = [
        pl.BlockSpec((1, rows_in, tl), lambda b, j: (b, 0, j)),
        # previous / next 128-lane chunks (halo), clamped at the sequence ends;
        # the kernel zero-masks them at j == 0 / j == nj-1.
        pl.BlockSpec((1, rows_in, 128),
                     lambda b, j: (b, 0, jnp.maximum(j * bpt - 1, 0))),
        pl.BlockSpec((1, rows_in, 128),
                     lambda b, j: (b, 0, jnp.minimum((j + 1) * bpt, nb_pad - 1))),
        pl.BlockSpec((k, rows_in, 1), lambda b, j: (0, 0, 0)),
        pl.BlockSpec((rows_out, rows_in), lambda b, j: (0, 0)),
        pl.BlockSpec((rows_out, 1), lambda b, j: (0, 0)),
    ]

    kernel = functools.partial(
        _dsconv_kernel, k=k, pad=pad, tl=tl, lc=lc,
        mxu_dtype=jnp.bfloat16 if mxu_bf16 else jnp.float32)

    out = pl.pallas_call(
        kernel,
        out_shape=jax.ShapeDtypeStruct((n_b, rows_out, l_pad), x.dtype),
        grid_spec=pltpu.PrefetchScalarGridSpec(
            num_scalar_prefetch=0,
            grid=(n_b, nj),
            in_specs=in_specs,
            # Lane-dense output: last block dim is TL, a multiple of 128.
            out_specs=pl.BlockSpec((1, rows_out, tl), lambda b, j: (b, 0, j)),
        ),
        compiler_params=pltpu.CompilerParams(
            # Independent axes -> shardable across v7x's 2 TensorCores.
            dimension_semantics=("parallel", "parallel"),
            vmem_limit_bytes=int(budget),
        ),
    )(xp, xp, xp, wd_k, wp_bd, bp_eff)

    out = out.reshape(n, c_out, l_pad)
    return out if l_pad == l else out[:, :, :l]


# --------------------------------------------------------------------------- #
# Reference + tests
# --------------------------------------------------------------------------- #
def _reference(x_ncl, wd, bd, wp, bp, k):
    """Pure-JAX reference (lax conv) for correctness check."""
    pad = k // 2
    n, c_in, l = x_ncl.shape
    dw = jax.lax.conv_general_dilated(
        x_ncl, wd, window_strides=(1,), padding=[(pad, pad)],
        dimension_numbers=("NCH", "OIH", "NCH"), feature_group_count=c_in)
    dw = dw + bd.reshape(1, c_in, 1)
    pw = jax.lax.conv_general_dilated(
        dw, wp, window_strides=(1,), padding=[(0, 0)],
        dimension_numbers=("NCH", "OIH", "NCH"))
    return pw + bp.reshape(1, wp.shape[0], 1)


if __name__ == "__main__":
    # ---- Case 1: small shapes consistent with the module; exercises batch-to-
    # ---- sublane packing (Cin=4 -> BT=2), L padding (16 -> 128), f32 MXU path.
    N, C_IN, C_OUT, L, K = 2, 4, 8, 16, 5
    key = jax.random.PRNGKey(0)
    k_x, k_wd, k_wp = jax.random.split(key, 3)

    x = jax.random.normal(k_x, (N, C_IN, L), dtype=jnp.float32)
    # Parameter init mirrors the module: kaiming-normal-like depthwise weight,
    # zero biases, normal pointwise weight.
    wd = jax.random.normal(k_wd, (C_IN, 1, K), dtype=jnp.float32) * (2.0 / K) ** 0.5
    bd = jnp.zeros((C_IN,), dtype=jnp.float32)
    wp = jax.random.normal(k_wp, (C_OUT, C_IN, 1), dtype=jnp.float32) * (2.0 / C_IN) ** 0.5
    bp = jnp.zeros((C_OUT,), dtype=jnp.float32)

    out = jax.block_until_ready(
        depthwise_separable_conv1d(x, wd, bd, wp, bp, K, mxu_bf16=False))
    ref = _reference(x, wd, bd, wp, bp, K)
    assert out.shape == ref.shape == (N, C_OUT, L), (out.shape, ref.shape)
    assert jnp.allclose(out, ref, atol=1e-3, rtol=1e-3), "mismatch vs reference (case 1)"

    # ---- Case 2: multi-tile halo path (N=1 -> nj>=2), non-128-multiple L,
    # ---- nonzero biases; checked in both f32 and bf16 MXU modes.
    N2, C2_IN, C2_OUT, L2, K2 = 1, 8, 16, 600, 7
    ks = jax.random.split(jax.random.PRNGKey(1), 5)
    x2 = jax.random.normal(ks[0], (N2, C2_IN, L2), dtype=jnp.float32)
    wd2 = jax.random.normal(ks[1], (C2_IN, 1, K2), dtype=jnp.float32) * (2.0 / K2) ** 0.5
    bd2 = jax.random.normal(ks[2], (C2_IN,), dtype=jnp.float32) * 0.1
    wp2 = jax.random.normal(ks[3], (C2_OUT, C2_IN, 1), dtype=jnp.float32) * (2.0 / C2_IN) ** 0.5
    bp2 = jax.random.normal(ks[4], (C2_OUT,), dtype=jnp.float32) * 0.1

    ref2 = _reference(x2, wd2, bd2, wp2, bp2, K2)

    out2_f32 = jax.block_until_ready(
        depthwise_separable_conv1d(x2, wd2, bd2, wp2, bp2, K2, mxu_bf16=False))
    assert out2_f32.shape == ref2.shape == (N2, C2_OUT, L2)
    assert jnp.allclose(out2_f32, ref2, atol=1e-3, rtol=1e-3), \
        "mismatch vs reference (case 2, f32)"

    out2_bf16 = jax.block_until_ready(
        depthwise_separable_conv1d(x2, wd2, bd2, wp2, bp2, K2))   # bf16 MXU default
    assert out2_bf16.shape == ref2.shape
    assert jnp.allclose(out2_bf16, ref2, atol=5e-2, rtol=5e-2), \
        "mismatch vs reference (case 2, bf16)"

    print("KERNEL_OK")
</pallas_src>

<mosaic_0001>
module attributes {stable_mosaic.version = 11 : i64} {
  func.func @_dsconv_kernel(%arg0: i32, %arg1: i32, %arg2: memref<1x8x128xf32, #tpu.memory_space<vmem>>, %arg3: memref<1x8x128xf32, #tpu.memory_space<vmem>>, %arg4: memref<1x8x128xf32, #tpu.memory_space<vmem>>, %arg5: memref<5x8x1xf32, #tpu.memory_space<vmem>>, %arg6: memref<16x8xf32, #tpu.memory_space<vmem>>, %arg7: memref<16x1xf32, #tpu.memory_space<vmem>>, %arg8: memref<1x16x128xf32, #tpu.memory_space<vmem>>) attributes {dimension_semantics = [#tpu.dimension_semantics<parallel>, #tpu.dimension_semantics<parallel>], iteration_bounds = array<i64: 1, 1>, scalar_prefetch = 0 : i64, scratch_operands = 0 : i64, tpu.core_type = #tpu.core_type<tc>, window_params = [{transform_indices = @transform_0, window_bounds = array<i64: 1, 8, 128>}, {transform_indices = @transform_1, window_bounds = array<i64: 1, 8, 128>}, {transform_indices = @transform_2, window_bounds = array<i64: 1, 8, 128>}, {pipeline_mode = #tpu.pipeline_mode<synchronous>, transform_indices = @transform_3, window_bounds = array<i64: 5, 8, 1>}, {pipeline_mode = #tpu.pipeline_mode<synchronous>, transform_indices = @transform_4, window_bounds = array<i64: 16, 8>}, {pipeline_mode = #tpu.pipeline_mode<synchronous>, transform_indices = @transform_5, window_bounds = array<i64: 16, 1>}, {transform_indices = @transform_6, window_bounds = array<i64: 1, 16, 128>}]} {
    %cst = arith.constant 0.000000e+00 : f32
    %0 = vector.broadcast %cst : f32 to vector<8x128xf32>
    %c0_i32 = arith.constant 0 : i32
    %1 = arith.cmpi eq, %arg1, %c0_i32 : i32
    %c0 = arith.constant 0 : index
    %c0_0 = arith.constant 0 : index
    %c0_1 = arith.constant 0 : index
    %2 = vector.load %arg3[%c0, %c0_0, %c0_1] : memref<1x8x128xf32, #tpu.memory_space<vmem>>, vector<1x8x128xf32>
    %3 = vector.shape_cast %2 : vector<1x8x128xf32> to vector<8x128xf32>
    %4 = arith.select %1, %0, %3 : vector<8x128xf32>
    %c0_i32_2 = arith.constant 0 : i32
    %5 = arith.cmpi eq, %arg1, %c0_i32_2 : i32
    %c0_3 = arith.constant 0 : index
    %c0_4 = arith.constant 0 : index
    %c0_5 = arith.constant 0 : index
    %6 = vector.load %arg4[%c0_3, %c0_4, %c0_5] : memref<1x8x128xf32, #tpu.memory_space<vmem>>, vector<1x8x128xf32>
    %7 = vector.shape_cast %6 : vector<1x8x128xf32> to vector<8x128xf32>
    %8 = arith.select %5, %0, %7 : vector<8x128xf32>
    %c0_6 = arith.constant 0 : index
    %c0_7 = arith.constant 0 : index
    %c0_8 = arith.constant 0 : index
    %9 = vector.load %arg5[%c0_6, %c0_7, %c0_8] : memref<5x8x1xf32, #tpu.memory_space<vmem>>, vector<1x8x1xf32>
    %10 = vector.shape_cast %9 : vector<1x8x1xf32> to vector<8x1xf32>
    %c1 = arith.constant 1 : index
    %c0_9 = arith.constant 0 : index
    %c0_10 = arith.constant 0 : index
    %11 = vector.load %arg5[%c1, %c0_9, %c0_10] : memref<5x8x1xf32, #tpu.memory_space<vmem>>, vector<1x8x1xf32>
    %12 = vector.shape_cast %11 : vector<1x8x1xf32> to vector<8x1xf32>
    %c2 = arith.constant 2 : index
    %c0_11 = arith.constant 0 : index
    %c0_12 = arith.constant 0 : index
    %13 = vector.load %arg5[%c2, %c0_11, %c0_12] : memref<5x8x1xf32, #tpu.memory_space<vmem>>, vector<1x8x1xf32>
    %14 = vector.shape_cast %13 : vector<1x8x1xf32> to vector<8x1xf32>
    %c3 = arith.constant 3 : index
    %c0_13 = arith.constant 0 : index
    %c0_14 = arith.constant 0 : index
    %15 = vector.load %arg5[%c3, %c0_13, %c0_14] : memref<5x8x1xf32, #tpu.memory_space<vmem>>, vector<1x8x1xf32>
    %16 = vector.shape_cast %15 : vector<1x8x1xf32> to vector<8x1xf32>
    %c4 = arith.constant 4 : index
    %c0_15 = arith.constant 0 : index
    %c0_16 = arith.constant 0 : index
    %17 = vector.load %arg5[%c4, %c0_15, %c0_16] : memref<5x8x1xf32, #tpu.memory_space<vmem>>, vector<1x8x1xf32>
    %18 = vector.shape_cast %17 : vector<1x8x1xf32> to vector<8x1xf32>
    %c0_17 = arith.constant 0 : index
    %c0_18 = arith.constant 0 : index
    %19 = vector.load %arg6[%c0_17, %c0_18] : memref<16x8xf32, #tpu.memory_space<vmem>>, vector<16x8xf32>
    %c0_19 = arith.constant 0 : index
    %c0_20 = arith.constant 0 : index
    %20 = vector.load %arg7[%c0_19, %c0_20] : memref<16x1xf32, #tpu.memory_space<vmem>>, vector<16x1xf32>
    %c0_21 = arith.constant 0 : index
    %c0_22 = arith.constant 0 : index
    %c0_23 = arith.constant 0 : index
    %21 = vector.load %arg2[%c0_21, %c0_22, %c0_23] : memref<1x8x128xf32, #tpu.memory_space<vmem>>, vector<1x8x128xf32>
    %22 = vector.shape_cast %21 : vector<1x8x128xf32> to vector<8x128xf32>
    %23 = tpu.concatenate %4, %22, %8 in 1 : vector<8x128xf32>, vector<8x128xf32>, vector<8x128xf32> -> vector<8x384xf32>
    %24 = vector.extract_strided_slice %23 {offsets = [0, 126], sizes = [8, 128], strides = [1, 1]} : vector<8x384xf32> to vector<8x128xf32>
    %25 = vector.broadcast %10 : vector<8x1xf32> to vector<8x128xf32>
    %26 = arith.mulf %24, %25 : vector<8x128xf32>
    %27 = vector.extract_strided_slice %23 {offsets = [0, 127], sizes = [8, 128], strides = [1, 1]} : vector<8x384xf32> to vector<8x128xf32>
    %28 = vector.broadcast %12 : vector<8x1xf32> to vector<8x128xf32>
    %29 = arith.mulf %27, %28 : vector<8x128xf32>
    %30 = arith.addf %26, %29 : vector<8x128xf32>
    %31 = vector.extract_strided_slice %23 {offsets = [0, 128], sizes = [8, 128], strides = [1, 1]} : vector<8x384xf32> to vector<8x128xf32>
    %32 = vector.broadcast %14 : vector<8x1xf32> to vector<8x128xf32>
    %33 = arith.mulf %31, %32 : vector<8x128xf32>
    %34 = arith.addf %30, %33 : vector<8x128xf32>
    %35 = vector.extract_strided_slice %23 {offsets = [0, 129], sizes = [8, 128], strides = [1, 1]} : vector<8x384xf32> to vector<8x128xf32>
    %36 = vector.broadcast %16 : vector<8x1xf32> to vector<8x128xf32>
    %37 = arith.mulf %35, %36 : vector<8x128xf32>
    %38 = arith.addf %34, %37 : vector<8x128xf32>
    %39 = vector.extract_strided_slice %23 {offsets = [0, 130], sizes = [8, 128], strides = [1, 1]} : vector<8x384xf32> to vector<8x128xf32>
    %40 = vector.broadcast %18 : vector<8x1xf32> to vector<8x128xf32>
    %41 = arith.mulf %39, %40 : vector<8x128xf32>
    %42 = arith.addf %38, %41 : vector<8x128xf32>
    %cst_24 = arith.constant dense<0.000000e+00> : vector<16x128xf32>
    %43 = tpu.matmul %19, %42, %cst_24 {dimension_numbers = #tpu.dot_dimension_numbers<[1], [0], [0], [1], [0, 0, 1, 1], [], []>} : vector<16x8xf32>, vector<8x128xf32>, vector<16x128xf32> -> vector<16x128xf32>
    %44 = vector.broadcast %20 : vector<16x1xf32> to vector<16x128xf32>
    %45 = arith.addf %43, %44 : vector<16x128xf32>
    %c0_25 = arith.constant 0 : index
    %c0_26 = arith.constant 0 : index
    %c0_27 = arith.constant 0 : index
    %46 = vector.load %arg8[%c0_25, %c0_26, %c0_27] : memref<1x16x128xf32, #tpu.memory_space<vmem>>, vector<1x16x128xf32>
    %47 = vector.shape_cast %46 : vector<1x16x128xf32> to vector<16x128xf32>
    %48 = vector.shape_cast %45 : vector<16x128xf32> to vector<1x16x128xf32>
    tpu.vector_store %arg8[%c0_25, %c0_26, %c0_27], %48 {strides = array<i32>} : memref<1x16x128xf32, #tpu.memory_space<vmem>>, vector<1x16x128xf32>,
    return
  }
  func.func @transform_0(%arg0: i32, %arg1: i32) -> (i32, i32, i32) {
    %c0_i32 = arith.constant 0 : i32
    %c0_i32_0 = arith.constant 0 : i32
    return %arg0, %c0_i32, %arg1 : i32, i32, i32
  }
  func.func @transform_1(%arg0: i32, %arg1: i32) -> (i32, i32, i32) {
    %c1_i32 = arith.constant 1 : i32
    %0 = arith.muli %arg1, %c1_i32 : i32
    %c1_i32_0 = arith.constant 1 : i32
    %1 = arith.subi %0, %c1_i32_0 : i32
    %c0_i32 = arith.constant 0 : i32
    %2 = arith.maxsi %1, %c0_i32 : i32
    %c0_i32_1 = arith.constant 0 : i32
    %c0_i32_2 = arith.constant 0 : i32
    return %arg0, %c0_i32_1, %2 : i32, i32, i32
  }
  func.func @transform_2(%arg0: i32, %arg1: i32) -> (i32, i32, i32) {
    %c1_i32 = arith.constant 1 : i32
    %0 = arith.addi %arg1, %c1_i32 : i32
    %c1_i32_0 = arith.constant 1 : i32
    %1 = arith.muli %0, %c1_i32_0 : i32
    %c0_i32 = arith.constant 0 : i32
    %2 = arith.minsi %1, %c0_i32 : i32
    %c0_i32_1 = arith.constant 0 : i32
    %c0_i32_2 = arith.constant 0 : i32
    return %arg0, %c0_i32_1, %2 : i32, i32, i32
  }
  func.func @transform_3(%arg0: i32, %arg1: i32) -> (i32, i32, i32) {
    %c0_i32 = arith.constant 0 : i32
    %c0_i32_0 = arith.constant 0 : i32
    %c0_i32_1 = arith.constant 0 : i32
    %c0_i32_2 = arith.constant 0 : i32
    return %c0_i32, %c0_i32_0, %c0_i32_1 : i32, i32, i32
  }
  func.func @transform_4(%arg0: i32, %arg1: i32) -> (i32, i32) {
    %c0_i32 = arith.constant 0 : i32
    %c0_i32_0 = arith.constant 0 : i32
    %c0_i32_1 = arith.constant 0 : i32
    return %c0_i32, %c0_i32_0 : i32, i32
  }
  func.func @transform_5(%arg0: i32, %arg1: i32) -> (i32, i32) {
    %c0_i32 = arith.constant 0 : i32
    %c0_i32_0 = arith.constant 0 : i32
    %c0_i32_1 = arith.constant 0 : i32
    return %c0_i32, %c0_i32_0 : i32, i32
  }
  func.func @transform_6(%arg0: i32, %arg1: i32) -> (i32, i32, i32) {
    %c0_i32 = arith.constant 0 : i32
    %c0_i32_0 = arith.constant 0 : i32
    return %arg0, %c0_i32, %arg1 : i32, i32, i32
  }
}

</mosaic_0001>

<llo_original>
// kernel: tpu_custom_call.1
$region0: #{tpu_custom_call.1}
  #allocation0 [shape = 'u32[]', space=smem, size = 0x4, offset = 0x4, fixed_abs, tag = 'smem constant byte address 0x4 - core index']
  #allocation1 [shape = 'u32[144,128]{1,0:T(1,128)}', space=vmem, size = 0x12000, scoped, tag = 'internal scratch']
  %s0 = inlined_call_operand.vmem [shape: f32[1,8,128], index: 0, kind: input, shape index: {}]
  %s1 = inlined_call_operand.vmem [shape: f32[1,8,128], index: 1, kind: input, shape index: {}]
  %s2 = inlined_call_operand.vmem [shape: f32[1,8,128], index: 2, kind: input, shape index: {}]
  %s3 = inlined_call_operand.vmem [shape: f32[5,8,1], index: 3, kind: input, shape index: {}]
  %s4 = inlined_call_operand.vmem [shape: f32[16,8], index: 4, kind: input, shape index: {}]
  %s5 = inlined_call_operand.vmem [shape: f32[16,1], index: 5, kind: input, shape index: {}]
  %s6 = inlined_call_operand.hbm [shape: f32[1,16,128], index: 6, kind: output, shape index: {}]
  %s7 = sld [smem:[#allocation0]]
  $region34: #{tpu_custom_call.1} parent=0
    _
  %s9 = ssub.s32 1, %s7
  %s10 = scalar_select 0, %s9, %s7
  $region1: #{tpu_custom_call.1} parent=0
    #allocation2 [shape = 'u8[8192]{0}', space=vmem, size = 0x2000, scoped, tag = 'output window, operand 0, single buffered']
    #allocation3 [shape = 's32[1]{0}', space=sflag, size = 0x4, scoped, tag = 'scoped memory for tpu_custom_call.1']
    %11 = vsyncpa [#allocation3], 0
    // Predicated region
    $region2: #{tpu_custom_call.1} parent=1 // pred_check
      _
    $region3: #{tpu_custom_call.1} parent=1 // pred_check_branch
      %13 = sbr.rel (0) target = $region5
    $region4: #{tpu_custom_call.1} parent=1 // pred_region
      _
    $region5: #{tpu_custom_call.1} parent=1 // pred_fallthru
      _
    // Predicated region
    $region6: #{tpu_custom_call.1} parent=1 // pred_check
      _
    $region7: #{tpu_custom_call.1} parent=1 // pred_check_branch
      %15 = sbr.rel (0) target = $region9
    $region8: #{tpu_custom_call.1} parent=1 // pred_region
      %s16 = ssub.s32 0, 1
      %p17 = scmp.gt.s32.totalorder %s16, 0
      %s18 = scalar_select %p17, %s16, 0
      %p19 = scmp.lt.s32.totalorder %s18, 0
      %s20 = scalar_select %p19, %s18, 0
      %s21 = smul.addr %s20, 8
      %s22 = scalar_lea.vmem %s1, %s21
      %s23 = ssub.s32 0, 1
      %p24 = scmp.gt.s32.totalorder %s23, 0
      %s25 = scalar_select %p24, %s23, 0
    $region9: #{tpu_custom_call.1} parent=1 // pred_fallthru
      _
    // Predicated region
    $region10: #{tpu_custom_call.1} parent=1 // pred_check
      _
    $region11: #{tpu_custom_call.1} parent=1 // pred_check_branch
      %27 = sbr.rel (0) target = $region13
    $region12: #{tpu_custom_call.1} parent=1 // pred_region
      %s28 = sadd.s32 0, 1
      %p29 = scmp.lt.s32.totalorder %s28, 0
      %s30 = scalar_select %p29, %s28, 0
      %p31 = scmp.lt.s32.totalorder %s30, 0
      %s32 = scalar_select %p31, %s30, 0
      %s33 = smul.addr %s32, 8
      %s34 = scalar_lea.vmem %s2, %s33
      %s35 = sadd.s32 0, 1
      %p36 = scmp.lt.s32.totalorder %s35, 0
      %s37 = scalar_select %p36, %s35, 0
    $region13: #{tpu_custom_call.1} parent=1 // pred_fallthru
      _
    // Predicated region
    $region14: #{tpu_custom_call.1} parent=1 // pred_check
      _
    $region15: #{tpu_custom_call.1} parent=1 // pred_check_branch
      %39 = sbr.rel (0) target = $region17
    $region16: #{tpu_custom_call.1} parent=1 // pred_region
      _
    $region17: #{tpu_custom_call.1} parent=1 // pred_fallthru
      _
    // Predicated region
    $region18: #{tpu_custom_call.1} parent=1 // pred_check
      _
    $region19: #{tpu_custom_call.1} parent=1 // pred_check_branch
      %41 = sbr.rel (0) target = $region21
    $region20: #{tpu_custom_call.1} parent=1 // pred_region
      _
    $region21: #{tpu_custom_call.1} parent=1 // pred_fallthru
      _
    // Predicated region
    $region22: #{tpu_custom_call.1} parent=1 // pred_check
      _
    $region23: #{tpu_custom_call.1} parent=1 // pred_check_branch
      %43 = sbr.rel (0) target = $region25
    $region24: #{tpu_custom_call.1} parent=1 // pred_region
      _
    $region25: #{tpu_custom_call.1} parent=1 // pred_fallthru
      _
    %s44 = ssub.s32 0, 1
    %p45 = scmp.gt.s32.totalorder %s44, 0
    %s46 = scalar_select %p45, %s44, 0
    %p47 = scmp.lt.s32.totalorder %s46, 0
    %s48 = scalar_select %p47, %s46, 0
    %s49 = smul.addr %s48, 8
    %s50 = scalar_lea.vmem %s1, %s49
    %s51 = sadd.s32 0, 1
    %p52 = scmp.lt.s32.totalorder %s51, 0
    %s53 = scalar_select %p52, %s51, 0
    %p54 = scmp.lt.s32.totalorder %s53, 0
    %s55 = scalar_select %p54, %s53, 0
    %s56 = smul.addr %s55, 8
    %s57 = scalar_lea.vmem %s2, %s56
    %s58 = ssub.s32 0, 1
    %p59 = scmp.gt.s32.totalorder %s58, 0
    %s60 = scalar_select %p59, %s58, 0
    %p61 = scmp.lt.s32.totalorder %s60, 0
    %s62 = scalar_select %p61, %s60, 0
    %s63 = smul.addr %s62, 8
    %s64 = scalar_lea.vmem %s1, %s63
    %s65 = ssub.s32 0, 1
    %p66 = scmp.gt.s32.totalorder %s65, 0
    %s67 = scalar_select %p66, %s65, 0
    %s68 = sadd.s32 0, 1
    %p69 = scmp.lt.s32.totalorder %s68, 0
    %s70 = scalar_select %p69, %s68, 0
    %p71 = scmp.lt.s32.totalorder %s70, 0
    %s72 = scalar_select %p71, %s70, 0
    %s73 = smul.addr %s72, 8
    %s74 = scalar_lea.vmem %s2, %s73
    %s75 = sadd.s32 0, 1
    %p76 = scmp.lt.s32.totalorder %s75, 0
    %s77 = scalar_select %p76, %s75, 0
    %p78 = scmp.eq.s32.totalorder 0, 0
    %v79 = vld [vmem:[%s64] sm:$0xff]
    %s80 = scalar_select %p78, 1, 0
    %v81 = vstv %s80
    %vm82 = vcmp.eq.s32.totalorder %v81, 1
    %v83 = vsel %vm82, 0.0, %v79
    %v84 = vld [vmem:[%s74] sm:$0xff]
    %v85 = vsel %vm82, 0.0, %v84
    %v86 = vld [vmem:[%s3] sm:$0xff]
    %s87 = scalar_lea.vmem %s3, 8
    %v88 = vld [vmem:[%s87] sm:$0xff]
    %s89 = scalar_lea.vmem %s3, 16
    %v90 = vld [vmem:[%s89] sm:$0xff]
    %s91 = scalar_lea.vmem %s3, 24
    %v92 = vld [vmem:[%s91] sm:$0xff]
    %s93 = scalar_lea.vmem %s3, 32
    %v94 = vld [vmem:[%s93] sm:$0xff]
    %v95 = vld [vmem:[%s4] sm:$0xff]
    %v96 = vld [vmem:[%s4 + $0x8] sm:$0xff]
    %v97 = vld [vmem:[%s5] sm:$0xff]
    %v98 = vld [vmem:[%s5 + $0x8] sm:$0xff]
    %v99 = vld [vmem:[%s0] sm:$0xff]
    %101 = vset.pattern.permute.xlu0 0
    %102 = vperm.xlu0 %101, %v86
    %v103 = vpop.permute.xlu0 %102
    %v105 = vmul.f32 %v83, %v103
    %v106 = vmul.f32 %v99, %v103
    %108 = vset.pattern.permute.xlu0 0
    %109 = vperm.xlu0 %108, %v88
    %v110 = vpop.permute.xlu0 %109
    %v112 = vmul.f32 %v83, %v110
    %v113 = vmul.f32 %v99, %v110
    %116 = vrot.lane.b32.xlu0 %v112, 127
    %v117 = vpop.permute.xlu0 %116
    %118 = vrot.lane.b32.xlu0 %v113, 127
    %v119 = vpop.permute.xlu0 %118
    %vm120 = vcmask 1039360
    %v121 = vsel %vm120, %v117, %v119
    %v124 = vadd.f32 %v105, %v121
    %v125 = vadd.f32 %v106, %v119
    %127 = vset.pattern.permute.xlu0 0
    %128 = vperm.xlu0 %127, %v90
    %v129 = vpop.permute.xlu0 %128
    %v131 = vmul.f32 %v99, %v129
    %133 = vrot.lane.b32.xlu0 %v131, 126
    %v134 = vpop.permute.xlu0 %133
    %v136 = vadd.f32 %v124, %v134
    %v137 = vadd.f32 %v125, %v134
    %139 = vset.pattern.permute.xlu0 0
    %140 = vperm.xlu0 %139, %v92
    %v141 = vpop.permute.xlu0 %140
    %v143 = vmul.f32 %v99, %v141
    %v144 = vmul.f32 %v85, %v141
    %147 = vrot.lane.b32.xlu0 %v143, 125
    %v148 = vpop.permute.xlu0 %147
    %149 = vrot.lane.b32.xlu0 %v144, 125
    %v150 = vpop.permute.xlu0 %149
    %vm151 = vcmask 1022976
    %v152 = vsel %vm151, %v148, %v150
    %v155 = vadd.f32 %v136, %v148
    %v156 = vadd.f32 %v137, %v152
    %158 = vset.pattern.permute.xlu0 0
    %159 = vperm.xlu0 %158, %v94
    %v160 = vpop.permute.xlu0 %159
    %v162 = vmul.f32 %v99, %v160
    %v163 = vmul.f32 %v85, %v160
    %166 = vrot.lane.b32.xlu0 %v162, 124
    %v167 = vpop.permute.xlu0 %166
    %168 = vrot.lane.b32.xlu0 %v163, 124
    %v169 = vpop.permute.xlu0 %168
    %vm170 = vcmask 1014784
    %v171 = vsel %vm170, %v167, %v169
    %v174 = vadd.f32 %v155, %v167
    %v175 = vadd.f32 %v156, %v171
    %177 = vset.pattern.permute.xlu0 0
    %178 = vperm.xlu0 %177, %v97
    %v179 = vpop.permute.xlu0 %178
    %182 = vset.pattern.permute.xlu0 0
    %183 = vperm.xlu0 %182, %v98
    %v184 = vpop.permute.xlu0 %183
    %188 = vrot.lane.b32.xlu0 %v174, 2
    %v189 = vpop.permute.xlu0 %188
    %190 = vrot.lane.b32.xlu0 %v175, 2
    %v191 = vpop.permute.xlu0 %190
    %vm192 = vcmask 15360
    %v193 = vsel %vm192, %v189, %v191
    %vm195 = vcmask 64512
    %v197 = vsel %vm195, %v95, 0
    %v200 = vsel %vm195, %v96, 0
    %202 = vmatprep.subr.mxu0 0.0
    %203 = vmatpush1.msra.mxu0 0.0
    %204 = vmatprep.subr.mxu0 0.0
    %205 = vmatpush1.msra.mxu0 0.0
    %206 = vmatprep.subr.mxu0 0.0
    %207 = vmatpush1.msra.mxu0 0.0
    %208 = vmatprep.subr.mxu0 0.0
    %209 = vmatpush1.msra.mxu0 0.0
    %210 = vmatprep.subr.mxu0 0.0
    %211 = vmatpush1.msra.mxu0 0.0
    %212 = vmatprep.subr.mxu0 0.0
    %213 = vmatpush1.msra.mxu0 0.0
    %214 = vmatprep.subr.mxu0 0.0
    %215 = vmatpush1.msra.mxu0 0.0
    %216 = vmatprep.subr.mxu0 0.0
    %217 = vmatpush1.msra.mxu0 0.0
    %218 = vmatprep.subr.mxu0 0.0
    %219 = vmatpush1.msra.mxu0 0.0
    %220 = vmatprep.subr.mxu0 0.0
    %221 = vmatpush1.msra.mxu0 0.0
    %222 = vmatprep.subr.mxu0 0.0
    %223 = vmatpush1.msra.mxu0 0.0
    %224 = vmatprep.subr.mxu0 0.0
    %225 = vmatpush1.msra.mxu0 0.0
    %226 = vmatprep.subr.mxu0 0.0
    %227 = vmatpush1.msra.mxu0 0.0
    %228 = vmatprep.subr.mxu0 0.0
    %229 = vmatpush1.msra.mxu0 0.0
    %230 = vmatprep.subr.mxu0 0.0
    %231 = vmatpush1.msra.mxu0 0.0
    %232 = vmatprep.subr.mxu0 0.0
    %233 = vmatpush1.msra.mxu0 %v193
    %234 = vmatprep.subr.mxu0 0.0
    %235 = vmatpush2.msra.mxu0 0.0
    %236 = vmatprep.subr.mxu0 0.0
    %237 = vmatpush2.msra.mxu0 0.0
    %238 = vmatprep.subr.mxu0 0.0
    %239 = vmatpush2.msra.mxu0 0.0
    %240 = vmatprep.subr.mxu0 0.0
    %241 = vmatpush2.msra.mxu0 0.0
    %242 = vmatprep.subr.mxu0 0.0
    %243 = vmatpush2.msra.mxu0 0.0
    %244 = vmatprep.subr.mxu0 0.0
    %245 = vmatpush2.msra.mxu0 0.0
    %246 = vmatprep.subr.mxu0 0.0
    %247 = vmatpush2.msra.mxu0 0.0
    %248 = vmatprep.subr.mxu0 0.0
    %249 = vmatpush2.msra.mxu0 0.0
    %250 = vmatprep.subr.mxu0 0.0
    %251 = vmatpush2.msra.mxu0 0.0
    %252 = vmatprep.subr.mxu0 0.0
    %253 = vmatpush2.msra.mxu0 0.0
    %254 = vmatprep.subr.mxu0 0.0
    %255 = vmatpush2.msra.mxu0 0.0
    %256 = vmatprep.subr.mxu0 0.0
    %257 = vmatpush2.msra.mxu0 0.0
    %258 = vmatprep.subr.mxu0 0.0
    %259 = vmatpush2.msra.mxu0 0.0
    %260 = vmatprep.subr.mxu0 0.0
    %261 = vmatpush2.msra.mxu0 0.0
    %262 = vmatprep.subr.mxu0 0.0
    %263 = vmatpush2.msra.mxu0 0.0
    %264 = vmatprep.subr.mxu0 0.0
    %265 = vmatpush2.msra.mxu0 0.0
    %266 = vmatprep.mubr.f32.mxu0 0.0
    %267 = vmatmul.mubr.f32.gmra.mxu0 %v197
    %v268 = vpop.f32.mrf.mxu0
    %v269 = vadd.f32 %v179, %v268
    %v270 = vpop.f32.mrf.mxu0
    %271 = vmatprep.mubr.f32.mxu0 0.0
    %272 = vmatmul.mubr.f32.gmra.mxu0 %v200
    %v273 = vpop.f32.mrf.mxu0
    %v274 = vadd.f32 %v184, %v273
    %v275 = vpop.f32.mrf.mxu0
    %276 = vdwg.mxu0
    %277 = vst [vmem:[#allocation2] sm:$0xff] %v269
    %278 = vst [vmem:[#allocation2 + $0x8] sm:$0xff] %v274
    // Predicated region
    $region26: #{tpu_custom_call.1} parent=1 // pred_check
      _
    $region27: #{tpu_custom_call.1} parent=1 // pred_check_branch
      %280 = sbr.rel (0) target = $region29
    $region28: #{tpu_custom_call.1} parent=1 // pred_region
      %s282 = ssub.s32 256, 256
      %283 = vsyncadd [#allocation3], %s282
      %s284 = sshll.u32 [#allocation2], 4
      %s285 = int_to_ptr.vmem [resolvable:$true] %s284
      %290 = dma.vmem_to_hbm [thread:$0]  %s285, 256, %s6, [#allocation3], 128, 128, 8
    $region29: #{tpu_custom_call.1} parent=1 // pred_fallthru
      _
    // Predicated region
    $region30: #{tpu_custom_call.1} parent=1 // pred_check
      _
    $region31: #{tpu_custom_call.1} parent=1 // pred_check_branch
      %292 = sbr.rel (0) target = $region33
    $region32: #{tpu_custom_call.1} parent=1 // pred_region
      %293 = dma.done [#allocation3], 256
    $region33: #{tpu_custom_call.1} parent=1 // pred_fallthru
      _
    %294 = vsyncpa [#allocation3], 1

</llo_original>
